<compile_context>
chip_gen: v5e
topology: v5e:2x2
jax: 0.10.0
libtpu: 0.0.40
codegen_flags: <defaults>
</compile_context>

<pallas_src>
import functools

import jax
import jax.numpy as jnp
from jax.experimental import pallas as pl
from jax.experimental.pallas import tpu as pltpu

_MIB = 1024 * 1024
_TARGET_BLOCK_BYTES = 4 * _MIB     # in+out bytes per grid step (85%+ of HBM roofline)
_MIN_GRID_STEPS = 4                # keep the pipeline alive / both v7x TCs busy
_MIN_PIPELINE_BYTES = 1 * _MIB     # below this, a 1-step grid is fine


def _sublane_multiple(dtype) -> int:
    # Rows per vreg tile: 8 for 4-byte dtypes, 16 for 2-byte, 32 for 1-byte.
    return max(8, 32 // jnp.dtype(dtype).itemsize)


def _vmem_capacity_bytes() -> int:
    try:
        info = pltpu.get_tpu_info()
        cap = getattr(info, "vmem_capacity_bytes", None)
        if cap:
            return int(cap)
    except Exception:
        pass
    return 64 * _MIB  # conservative: v7x per-TensorCore VMEM


def _pad_kernel_concat(x_ref, o_ref, *, d_in, d_target, fold):
    """fold <= 2: assemble the tile in vregs, one full-width unmasked store.

    x_ref: (tile_n, fold * d_in)     -- `fold` original rows packed along lanes
    o_ref: (tile_n, fold * d_target) -- lane-dense when fold > 1
    """
    tile_n = x_ref.shape[0]
    pad_w = d_target - d_in
    pieces = []
    for i in range(fold):
        pieces.append(x_ref[:, i * d_in:(i + 1) * d_in])
        if pad_w > 0:
            pieces.append(jnp.zeros((tile_n, pad_w), dtype=o_ref.dtype))
    o_ref[...] = pieces[0] if len(pieces) == 1 else jnp.concatenate(pieces, axis=1)


def _pad_kernel_region(x_ref, o_ref, *, d_in, d_target, fold):
    """fold > 2: region stores (data cols, pad cols) instead of a concat chain.

    Avoids XLU rotates / VMEM temporaries from many unaligned lane slices;
    masked stores are free here because the kernel is HBM-bandwidth bound.
    """
    tile_n = x_ref.shape[0]
    pad_w = d_target - d_in
    zeros = jnp.zeros((tile_n, pad_w), dtype=o_ref.dtype) if pad_w > 0 else None
    for i in range(fold):
        o_ref[:, i * d_target:i * d_target + d_in] = x_ref[:, i * d_in:(i + 1) * d_in]
        if zeros is not None:
            o_ref[:, i * d_target + d_in:(i + 1) * d_target] = zeros


def vector_pad(
    x: jax.Array,
    d_target: int,
    *,
    tile_n: int | None = None,
    min_pallas_bytes: int = 64 * 1024,
    fold_lanes: bool = True,
) -> jax.Array:
    """Pallas equivalent of VectorPad(D=d_target).forward(x)."""
    n, d_in = x.shape
    assert d_target >= d_in, "target width must be >= input width"
    itemsize = jnp.dtype(x.dtype).itemsize

    # Tiny-problem fallback: pallas_call fixed overhead dominates; XLA's fused
    # pad wins (pass min_pallas_bytes=0 to force the kernel path).
    if n * d_target * itemsize < min_pallas_bytes:
        return jnp.pad(x, ((0, 0), (0, d_target - d_in)))

    # Lane-dense output trick: if D_target < 128 and divides 128, fold several
    # consecutive rows into one kernel row so the output last dim becomes 128
    # (unmasked full-lane stores).  Silently disabled when n % fold != 0.
    fold = 1
    if fold_lanes and d_target < 128 and 128 % d_target == 0:
        f = 128 // d_target
        if n % f == 0:
            fold = f

    n_rows = n // fold
    row_in_w = fold * d_in
    row_out_w = fold * d_target
    x_view = x.reshape(n_rows, row_in_w)

    # ---- Tile geometry: size by bytes, keep the pipeline multi-step. -------
    sub = _sublane_multiple(x.dtype)
    bytes_per_row = (row_in_w + row_out_w) * itemsize
    total_bytes = n_rows * bytes_per_row

    if tile_n is None:
        tile_n = max(sub, _TARGET_BLOCK_BYTES // max(bytes_per_row, 1))
        if total_bytes > _MIN_PIPELINE_BYTES:
            # Never collapse to 1 step: >= _MIN_GRID_STEPS keeps in-DMA /
            # out-DMA overlapped and lets megacore shard the parallel axis.
            tile_n = min(tile_n, max(sub, n_rows // _MIN_GRID_STEPS))

    if tile_n >= n_rows:
        tile_n = n_rows                      # full-extent block (always legal)
    else:
        tile_n = max(sub, (tile_n // sub) * sub)

    grid = (pl.cdiv(n_rows, tile_n),)

    # ---- Explicit VMEM budget (generation-aware). --------------------------
    in_block_bytes = tile_n * row_in_w * itemsize
    out_block_bytes = tile_n * row_out_w * itemsize
    # 2x double-buffer per operand + one extra out-block for in-kernel
    # temporaries + headroom; stay well under half the per-core VMEM.
    vmem_limit = 2 * (in_block_bytes + out_block_bytes) + out_block_bytes + 4 * _MIB
    vmem_limit = int(min(vmem_limit, _vmem_capacity_bytes() // 2))

    kernel_fn = _pad_kernel_concat if fold <= 2 else _pad_kernel_region
    kernel = functools.partial(kernel_fn, d_in=d_in, d_target=d_target, fold=fold)

    cost = pl.CostEstimate(
        flops=0,
        transcendentals=0,
        bytes_accessed=n * (d_in + d_target) * itemsize,
    )

    out = pl.pallas_call(
        kernel,
        out_shape=jax.ShapeDtypeStruct((n_rows, row_out_w), x.dtype),
        grid=grid,
        in_specs=[pl.BlockSpec((tile_n, row_in_w), lambda i: (i, 0))],
        out_specs=pl.BlockSpec((tile_n, row_out_w), lambda i: (i, 0)),
        compiler_params=pltpu.CompilerParams(
            dimension_semantics=("parallel",),
            vmem_limit_bytes=vmem_limit,
        ),
        cost_estimate=cost,
    )(x_view)

    return out.reshape(n, d_target)


def _reference(x: jax.Array, d_target: int) -> jax.Array:
    n, d_in = x.shape
    return jnp.zeros((n, d_target), dtype=x.dtype).at[:, :d_in].set(x)


if __name__ == "__main__":
    key = jax.random.PRNGKey(0)
    keys = jax.random.split(key, 8)

    # 1) Main demo: VectorPad(D=64) on a (16, 24) input.
    #    Exercises the lane-dense fold path (fold=2 -> kernel output width 128).
    N, D_IN, D_TARGET = 16, 24, 64
    x = jax.random.normal(keys[0], (N, D_IN), dtype=jnp.float32)
    z = vector_pad(x, D_TARGET, min_pallas_bytes=0)
    jax.block_until_ready(z)
    assert z.shape == (N, D_TARGET) and z.dtype == x.dtype
    assert jnp.array_equal(z, _reference(x, D_TARGET))

    # 2) Wide output (fold=1), full-extent row block.
    x2 = jax.random.normal(keys[1], (32, 40), dtype=jnp.float32)
    z2 = vector_pad(x2, 256, min_pallas_bytes=0)
    jax.block_until_ready(z2)
    assert jnp.array_equal(z2, _reference(x2, 256))

    # 3) Ragged row grid, fold=1 (n_rows not a multiple of tile_n).
    x3 = jax.random.normal(keys[2], (40, 100), dtype=jnp.float32)
    z3 = vector_pad(x3, 256, tile_n=16, min_pallas_bytes=0)
    jax.block_until_ready(z3)
    assert jnp.array_equal(z3, _reference(x3, 256))

    # 4) Large fold (d_target=8 -> fold=16) + ragged grid: region-store kernel.
    x4 = jax.random.normal(keys[3], (352, 6), dtype=jnp.float32)
    z4 = vector_pad(x4, 8, tile_n=8, min_pallas_bytes=0)
    jax.block_until_ready(z4)
    assert jnp.array_equal(z4, _reference(x4, 8))

    # 5) Medium f32 problem with default sizing: multi-step pipelined grid.
    x5 = jax.random.normal(keys[4], (8192, 192), dtype=jnp.float32)
    z5 = vector_pad(x5, 256)
    jax.block_until_ready(z5)
    assert jnp.array_equal(z5, _reference(x5, 256))

    # 6) Medium bf16 problem (sublane multiple 16), default sizing.
    x6 = jax.random.normal(keys[5], (4096, 96), dtype=jnp.float32).astype(jnp.bfloat16)
    z6 = vector_pad(x6, 128)
    jax.block_until_ready(z6)
    assert jnp.array_equal(z6, _reference(x6, 128))

    # 7) Tiny input: exercises the jnp.pad fallback (default threshold).
    x7 = jax.random.normal(keys[6], (4, 3), dtype=jnp.float32)
    z7 = vector_pad(x7, 16)
    jax.block_until_ready(z7)
    assert jnp.array_equal(z7, _reference(x7, 16))

    print("KERNEL_OK")
</pallas_src>

<mosaic_0001>
module attributes {stable_mosaic.version = 11 : i64} {
  func.func @_pad_kernel_concat(%arg0: i32, %arg1: memref<8x48xf32, #tpu.memory_space<vmem>>, %arg2: memref<8x128xf32, #tpu.memory_space<vmem>>) attributes {dimension_semantics = [#tpu.dimension_semantics<parallel>], iteration_bounds = array<i64: 1>, scalar_prefetch = 0 : i64, scratch_operands = 0 : i64, tpu.core_type = #tpu.core_type<tc>, window_params = [{transform_indices = @transform_0, window_bounds = array<i64: 8, 48>}, {transform_indices = @transform_1, window_bounds = array<i64: 8, 128>}]} {
    %c0 = arith.constant 0 : index
    %c0_0 = arith.constant 0 : index
    %0 = vector.load %arg1[%c0, %c0_0] : memref<8x48xf32, #tpu.memory_space<vmem>>, vector<8x24xf32>
    %cst = arith.constant 0.000000e+00 : f32
    %1 = vector.broadcast %cst : f32 to vector<8x40xf32>
    %c0_1 = arith.constant 0 : index
    %c24 = arith.constant 24 : index
    %2 = vector.load %arg1[%c0_1, %c24] : memref<8x48xf32, #tpu.memory_space<vmem>>, vector<8x24xf32>
    %cst_2 = arith.constant 0.000000e+00 : f32
    %3 = vector.broadcast %cst_2 : f32 to vector<8x40xf32>
    %4 = tpu.concatenate %0, %1, %2, %3 in 1 : vector<8x24xf32>, vector<8x40xf32>, vector<8x24xf32>, vector<8x40xf32> -> vector<8x128xf32>
    %c0_3 = arith.constant 0 : index
    %c0_4 = arith.constant 0 : index
    %5 = vector.load %arg2[%c0_3, %c0_4] : memref<8x128xf32, #tpu.memory_space<vmem>>, vector<8x128xf32>
    tpu.vector_store %arg2[%c0_3, %c0_4], %4 {strides = array<i32>} : memref<8x128xf32, #tpu.memory_space<vmem>>, vector<8x128xf32>,
    return
  }
  func.func @transform_0(%arg0: i32) -> (i32, i32) {
    %c0_i32 = arith.constant 0 : i32
    %c0_i32_0 = arith.constant 0 : i32
    return %arg0, %c0_i32 : i32, i32
  }
  func.func @transform_1(%arg0: i32) -> (i32, i32) {
    %c0_i32 = arith.constant 0 : i32
    %c0_i32_0 = arith.constant 0 : i32
    return %arg0, %c0_i32 : i32, i32
  }
}

</mosaic_0001>

<llo_original>
// kernel: tpu_custom_call.1
$region0: #{tpu_custom_call.1}
  #allocation0 [shape = 'u32[]', space=smem, size = 0x4, offset = 0x4, fixed_abs, tag = 'smem constant byte address 0x4 - core index']
  #allocation1 [shape = 'u32[72,128]{1,0:T(1,128)}', space=vmem, size = 0x9000, scoped, tag = 'internal scratch']
  %s0 = inlined_call_operand.hbm [shape: f32[8,48], index: 0, kind: input, shape index: {}]
  %s1 = inlined_call_operand.hbm [shape: f32[8,128], index: 1, kind: output, shape index: {}]
  %s2 = sld [smem:[#allocation0]]
  $region18: #{tpu_custom_call.1} parent=0
    _
  %s4 = ssub.s32 1, %s2
  %s5 = scalar_select 0, %s4, %s2
  $region1: #{tpu_custom_call.1} parent=0
    #allocation2 [shape = 'u8[4096]{0}', space=vmem, size = 0x1000, scoped, tag = 'input window, operand 0, single buffered']
    #allocation3 [shape = 's32[1]{0}', space=sflag, size = 0x4, scoped, tag = 'scoped memory for tpu_custom_call.1']
    #allocation4 [shape = 's32[1]{0}', space=sflag, size = 0x4, scoped, tag = 'scoped memory for tpu_custom_call.1']
    #allocation5 [shape = 'u8[4096]{0}', space=vmem, size = 0x1000, scoped, tag = 'output window, operand 0, single buffered']
    %6 = vsyncpa [#allocation3], 0
    %7 = vsyncpa [#allocation4], 0
    // Predicated region
    $region2: #{tpu_custom_call.1} parent=1 // pred_check
      _
    $region3: #{tpu_custom_call.1} parent=1 // pred_check_branch
      %9 = sbr.rel (0) target = $region5
    $region4: #{tpu_custom_call.1} parent=1 // pred_region
      %11 = vsyncadd [#allocation3], 0
      %s13 = sshll.u32 %s0, 4
      %s14 = int_to_ptr.hbm [resolvable:$true] %s13
      %s15 = sshll.u32 [#allocation2], 4
      %s16 = int_to_ptr.vmem [resolvable:$true] %s15
      %18 = dma.hbm_to_vmem [thread:$0]  %s14, 128, %s16, [#allocation3]
    $region5: #{tpu_custom_call.1} parent=1 // pred_fallthru
      _
    // Predicated region
    $region6: #{tpu_custom_call.1} parent=1 // pred_check
      _
    $region7: #{tpu_custom_call.1} parent=1 // pred_check_branch
      %20 = sbr.rel (0) target = $region9
    $region8: #{tpu_custom_call.1} parent=1 // pred_region
      %22 = dma.done [#allocation3], 128
    $region9: #{tpu_custom_call.1} parent=1 // pred_fallthru
      _
    %v23 = vld [vmem:[#allocation2] sm:$0xff]
    %25 = vrot.lane.b32.xlu0 %v23, 40
    %v26 = vpop.permute.xlu0 %25
    %vm28 = vcmask 195584
    %v29 = vsel %vm28, %v23, 0.0
    %vm30 = vcmask 523264
    %v31 = vsel %vm30, %v29, %v26
    %vm32 = vcmask 719872
    %v33 = vsel %vm32, %v31, 0.0
    %34 = vst [vmem:[#allocation5] sm:$0xff] %v33
    // Predicated region
    $region10: #{tpu_custom_call.1} parent=1 // pred_check
      _
    $region11: #{tpu_custom_call.1} parent=1 // pred_check_branch
      %36 = sbr.rel (0) target = $region13
    $region12: #{tpu_custom_call.1} parent=1 // pred_region
      %38 = vsyncadd [#allocation4], 0
      %s40 = sshll.u32 [#allocation5], 4
      %s41 = int_to_ptr.vmem [resolvable:$true] %s40
      %s42 = sshll.u32 %s1, 4
      %s43 = int_to_ptr.hbm [resolvable:$true] %s42
      %45 = dma.vmem_to_hbm [thread:$0]  %s41, 128, %s43, [#allocation4]
    $region13: #{tpu_custom_call.1} parent=1 // pred_fallthru
      _
    // Predicated region
    $region14: #{tpu_custom_call.1} parent=1 // pred_check
      _
    $region15: #{tpu_custom_call.1} parent=1 // pred_check_branch
      %47 = sbr.rel (0) target = $region17
    $region16: #{tpu_custom_call.1} parent=1 // pred_region
      %49 = dma.done [#allocation4], 128
    $region17: #{tpu_custom_call.1} parent=1 // pred_fallthru
      _
    %50 = vsyncpa [#allocation3], 1
    %51 = vsyncpa [#allocation4], 1

</llo_original>
